<compile_context>
chip_gen: v7x
topology: tpu7x:2x2x1
jax: 0.10.0
libtpu: 0.0.40
codegen_flags: <defaults>
</compile_context>

<pallas_src>
import numpy as np
import jax
import jax.numpy as jnp
from jax import lax
from jax.experimental import pallas as pl
from jax.experimental.pallas import tpu as pltpu

# ----------------------------- sizes -----------------------------------------
B, S, D, H = 2, 8, 32, 4          # batch, seq, d_embed, n_head
VOCAB = 64
D_FF = 64
BS = B * S                        # 16
HBS = H * BS                      # 64

# ------------------- packed-constants layout (rows x 64 cols) -----------------
PACK_COLS = 64                    # = max(D, D_FF, BS)
R_WQK = 0                         # (HBS, D)  W_q*W_k diag, head-outermost repeat
R_WV = R_WQK + HBS                # (HBS, D)  W_v*W_LR diag, head-outermost repeat
R_WN = R_WV + HBS                 # (BS, D)   W_N row scale 1/(s+1), batch-tiled
R_BIAS = R_WN + BS                # (HBS, BS) additive mask (0 / -inf)
R_W1 = R_BIAS + HBS               # (D, D_FF)
R_W2 = R_W1 + D                   # (D_FF, D)
R_EWTE = R_W2 + D_FF              # (1, D)    mean over vocab rows of wte
R_B1 = R_EWTE + 8                 # (1, D_FF)
R_B2 = R_B1 + 8                   # (1, D)
PACK_ROWS = R_B2 + 8              # 328  (every block starts 8-row aligned)


# ----------------------------- fused kernel ----------------------------------
def fused_block_kernel(acts_ref, consts_ref, out_ref):
    # acts_ref:   (3*BS, D)  rows [0:BS)=e, [BS:2BS)=q, [2BS:3BS)=k
    # consts_ref: (PACK_ROWS, PACK_COLS) packed parameters (layout above)
    # out_ref:    (BS, D)
    f32 = jnp.float32

    # ---- unpack (static, aligned slices — no data-dependent indexing) ----
    e = acts_ref[0:BS, :]
    q = acts_ref[BS:2 * BS, :]
    k = acts_ref[2 * BS:3 * BS, :]

    wqk_rep = consts_ref[R_WQK:R_WQK + HBS, 0:D]       # (64, 32)
    wv_rep = consts_ref[R_WV:R_WV + HBS, 0:D]          # (64, 32)
    wn_full = consts_ref[R_WN:R_WN + BS, 0:D]          # (16, 32)
    bias = consts_ref[R_BIAS:R_BIAS + HBS, 0:BS]       # (64, 16) 0 / -inf
    w1 = consts_ref[R_W1:R_W1 + D, 0:D_FF]             # (32, 64)
    w2 = consts_ref[R_W2:R_W2 + D_FF, 0:D]             # (64, 32)
    ewte = consts_ref[R_EWTE:R_EWTE + 1, 0:D]          # (1, 32)
    b1 = consts_ref[R_B1:R_B1 + 1, 0:D_FF]             # (1, 64)
    b2 = consts_ref[R_B2:R_B2 + 1, 0:D]                # (1, 32)

    # V = e - E_wte (shared across heads)
    v = e - ewte                                       # (16, 32)

    # b-term: sum over batch of (e - E_wte), replicated to every batch block.
    bsum = v[0:S, :]
    for bb in range(1, B):
        bsum = bsum + v[bb * S:(bb + 1) * S, :]
    vsum = jnp.concatenate([bsum] * B, axis=0)         # (16, 32)

    # Head-outermost stacked Q: row r = h*BS + (b*S + s); one multiply with the
    # host-folded W_q*W_k diagonal (repeated per head).
    q_stack = jnp.concatenate([q] * H, axis=0) * wqk_rep      # (64, 32)

    # ONE score matmul for all heads and batches:  'qd,kd->qk'.
    scores = lax.dot_general(q_stack, k, (((1,), (1,)), ((), ())),
                             preferred_element_type=f32)      # (64, 16)
    # Precomputed additive mask: causal AND same-batch (0 keep / -inf drop).
    scores = scores + bias
    scores = scores - jnp.max(scores, axis=-1, keepdims=True)  # finite max per row
    pexp = jnp.exp(scores)
    attn = pexp * pl.reciprocal(jnp.sum(pexp, axis=-1, keepdims=True), approx=True)

    # ONE context matmul for all heads/batches, then folded W_v*W_LR column scale.
    ctx = jnp.dot(attn, v, preferred_element_type=f32) * wv_rep   # (64, 32)

    # Sum over heads (sublane-aligned (BS, D) slices), add batch-summed b-term,
    # then a single W_N row scale (W_N commutes with both sums).
    y = ctx[0:BS, :]
    for h in range(1, H):
        y = y + ctx[h * BS:(h + 1) * BS, :]
    x = (y + vsum) * wn_full                                      # (16, 32)

    # Residual MLP (two MXU matmuls).
    h1 = jnp.dot(x, w1, preferred_element_type=f32) + b1          # (16, 64)
    # tanh-approx GELU (EUP); nn.GELU() is exact erf — deviation <~1e-3.
    h1 = jax.nn.gelu(h1, approximate=True)
    mlp = jnp.dot(h1, w2, preferred_element_type=f32) + b2        # (16, 32)
    # TODO(synk): nn.Dropout(p=0.0) in eval mode is identity; no dropout applied.
    out_ref[...] = (x + mlp).astype(out_ref.dtype)


# ----------------------------- host-side parameter fold -----------------------
def pack_block_params(wte_weight, wq_diag, wk_diag, wv_diag, w_lr, w1, b1, w2, b2):
    """One-time weight preprocessing: fold diagonals, build mask/W_N/E_wte and
    pack everything into a single (PACK_ROWS, PACK_COLS) f32 slab."""
    wqk_rep = jnp.repeat(wq_diag * wk_diag, BS, axis=0)            # (HBS, D)
    wv_rep = jnp.repeat(wv_diag * w_lr[:, None], BS, axis=0)       # (HBS, D)

    wn = 1.0 / (jnp.arange(S, dtype=jnp.float32) + 1.0)            # (S,)
    wn_full = jnp.broadcast_to(jnp.tile(wn, (B,))[:, None], (BS, D))

    # Additive attention bias for the head+batch stacked score matrix:
    # row r = h*BS + b*S + s  attends to col c = b'*S + s'  iff  b'==b and s'<=s.
    r = np.arange(HBS)
    c = np.arange(BS)
    same_batch = ((r[:, None] % BS) // S) == (c[None, :] // S)
    causal = (c[None, :] % S) <= (r[:, None] % S)
    bias = np.where(same_batch & causal, 0.0, -np.inf).astype(np.float32)

    ewte = jnp.mean(wte_weight, axis=0, keepdims=True)             # (1, D)

    def blk(a, rows):
        a = jnp.asarray(a, jnp.float32)
        return jnp.pad(a, ((0, rows - a.shape[0]), (0, PACK_COLS - a.shape[1])))

    consts = jnp.concatenate([
        blk(wqk_rep, HBS), blk(wv_rep, HBS), blk(wn_full, BS), blk(bias, HBS),
        blk(w1, D), blk(w2, D_FF), blk(ewte, 8), blk(b1, 8), blk(b2, 8),
    ], axis=0)
    assert consts.shape == (PACK_ROWS, PACK_COLS)
    return consts


# ----------------------------- wrapper ----------------------------------------
@jax.jit
def block_forward(e, p, consts):
    # Pack the three activations into one slab -> a single input DMA.
    acts = jnp.concatenate([e.reshape(BS, D),
                            p[:, 1:, :].reshape(BS, D),
                            p[:, :-1, :].reshape(BS, D)], axis=0)  # (48, 32)
    out = pl.pallas_call(
        fused_block_kernel,
        out_shape=jax.ShapeDtypeStruct((BS, D), jnp.float32),
        in_specs=[pl.BlockSpec(memory_space=pltpu.MemorySpace.VMEM),
                  pl.BlockSpec(memory_space=pltpu.MemorySpace.VMEM)],
        out_specs=pl.BlockSpec(memory_space=pltpu.MemorySpace.VMEM),
    )(acts, consts)
    return out.reshape(B, S, D)


# ----------------------------- pure-JAX reference ------------------------------
def reference(e, p, wte_weight, wq_diag, wk_diag, wv_diag, w_lr, w1, b1, w2, b2):
    E_wte = jnp.mean(wte_weight, axis=0)                      # (D,)
    Q = jnp.broadcast_to(p[:, 1:, :][:, None], (B, H, S, D))
    K = jnp.broadcast_to(p[:, :-1, :][:, None], (B, H, S, D))
    V = jnp.broadcast_to((e - E_wte)[:, None], (B, H, S, D))
    Q = Q * wq_diag[None, :, None, :]
    K = K * wk_diag[None, :, None, :]
    V = V * wv_diag[None, :, None, :]
    scores = jnp.einsum('bhqd,bhkd->bhqk', Q, K, precision=lax.Precision.HIGHEST)
    mask = jnp.tril(jnp.ones((S, S), dtype=bool))
    scores = jnp.where(mask, scores, -jnp.inf)
    attn = jax.nn.softmax(scores, axis=-1)
    y = jnp.einsum('bhqk,bhkd->bhqd', attn, V, precision=lax.Precision.HIGHEST)
    wn = (1.0 / (jnp.arange(S, dtype=jnp.float32) + 1.0))[None, None, :, None]
    y = y * wn                                                # W_N @ y
    y = y * w_lr[None, :, None, None]                         # * W_LR
    y = jnp.sum(y, axis=1)                                    # W_o_mode != 'proj'
    b = e - E_wte
    b = b * wn[0]                                             # W_N @ b  (row scale)
    y = y + jnp.sum(b, axis=0)[None]                          # torch.sum(b, dim=1)
    h = jax.nn.gelu(jnp.einsum('bsd,df->bsf', y, w1,
                               precision=lax.Precision.HIGHEST) + b1,
                    approximate=False)                        # nn.GELU() exact erf
    mlp = jnp.einsum('bsf,fd->bsd', h, w2, precision=lax.Precision.HIGHEST) + b2
    return y + mlp


# ----------------------------- main -------------------------------------------
if __name__ == "__main__":
    key = jax.random.PRNGKey(0)
    ks = jax.random.split(key, 11)

    wte_weight = jax.random.normal(ks[0], (VOCAB, D), jnp.float32) * 0.02
    wq_diag = jax.random.normal(ks[1], (H, D), jnp.float32) * 0.2
    wk_diag = jax.random.normal(ks[2], (H, D), jnp.float32) * 0.2
    wv_diag = jax.random.normal(ks[3], (H, D), jnp.float32) * 0.2
    w_lr = jax.random.normal(ks[4], (H,), jnp.float32) * 0.01
    w1 = jax.random.normal(ks[5], (D, D_FF), jnp.float32) * (1.0 / jnp.sqrt(D))
    b1 = jax.random.normal(ks[6], (1, D_FF), jnp.float32) * 0.01
    w2 = jax.random.normal(ks[7], (D_FF, D), jnp.float32) * (1.0 / jnp.sqrt(D_FF))
    b2 = jax.random.normal(ks[8], (1, D), jnp.float32) * 0.01

    e = jax.random.normal(ks[9], (B, S, D), jnp.float32)
    p = jax.random.normal(ks[10], (B, S + 1, D), jnp.float32)

    # One-time host-side fold + pack of all constant operands (single DMA).
    consts = pack_block_params(wte_weight, wq_diag, wk_diag, wv_diag, w_lr,
                               w1, b1, w2, b2)

    out = block_forward(e, p, consts)
    out = jax.block_until_ready(out)

    ref = reference(e, p, wte_weight, wq_diag, wk_diag, wv_diag, w_lr,
                    w1, b1, w2, b2)
    assert out.shape == (B, S, D)
    assert jnp.allclose(out, ref, atol=1e-2, rtol=1e-2), "mismatch vs JAX reference"

    print("KERNEL_OK")
</pallas_src>

<mosaic_0001>
module attributes {stable_mosaic.version = 11 : i64} {
  func.func @fused_block_kernel(%arg0: memref<48x32xf32, #tpu.memory_space<vmem>>, %arg1: memref<328x64xf32, #tpu.memory_space<vmem>>, %arg2: memref<16x32xf32, #tpu.memory_space<vmem>>) attributes {dimension_semantics = [], scalar_prefetch = 0 : i64, scratch_operands = 0 : i64, tpu.core_type = #tpu.core_type<tc>} {
    %c0 = arith.constant 0 : index
    %c0_0 = arith.constant 0 : index
    %0 = vector.load %arg0[%c0, %c0_0] : memref<48x32xf32, #tpu.memory_space<vmem>>, vector<16x32xf32>
    %c16 = arith.constant 16 : index
    %c0_1 = arith.constant 0 : index
    %1 = vector.load %arg0[%c16, %c0_1] : memref<48x32xf32, #tpu.memory_space<vmem>>, vector<16x32xf32>
    %c32 = arith.constant 32 : index
    %c0_2 = arith.constant 0 : index
    %2 = vector.load %arg0[%c32, %c0_2] : memref<48x32xf32, #tpu.memory_space<vmem>>, vector<16x32xf32>
    %c0_3 = arith.constant 0 : index
    %c0_4 = arith.constant 0 : index
    %3 = vector.load %arg1[%c0_3, %c0_4] : memref<328x64xf32, #tpu.memory_space<vmem>>, vector<64x32xf32>
    %c64 = arith.constant 64 : index
    %c0_5 = arith.constant 0 : index
    %4 = vector.load %arg1[%c64, %c0_5] : memref<328x64xf32, #tpu.memory_space<vmem>>, vector<64x32xf32>
    %c128 = arith.constant 128 : index
    %c0_6 = arith.constant 0 : index
    %5 = vector.load %arg1[%c128, %c0_6] : memref<328x64xf32, #tpu.memory_space<vmem>>, vector<16x32xf32>
    %c144 = arith.constant 144 : index
    %c0_7 = arith.constant 0 : index
    %6 = vector.load %arg1[%c144, %c0_7] : memref<328x64xf32, #tpu.memory_space<vmem>>, vector<64x16xf32>
    %c208 = arith.constant 208 : index
    %c0_8 = arith.constant 0 : index
    %7 = vector.load %arg1[%c208, %c0_8] : memref<328x64xf32, #tpu.memory_space<vmem>>, vector<32x64xf32>
    %c240 = arith.constant 240 : index
    %c0_9 = arith.constant 0 : index
    %8 = vector.load %arg1[%c240, %c0_9] : memref<328x64xf32, #tpu.memory_space<vmem>>, vector<64x32xf32>
    %c304 = arith.constant 304 : index
    %c0_10 = arith.constant 0 : index
    %9 = vector.load %arg1[%c304, %c0_10] : memref<328x64xf32, #tpu.memory_space<vmem>>, vector<1x32xf32>
    %c312 = arith.constant 312 : index
    %c0_11 = arith.constant 0 : index
    %10 = vector.load %arg1[%c312, %c0_11] : memref<328x64xf32, #tpu.memory_space<vmem>>, vector<1x64xf32>
    %c320 = arith.constant 320 : index
    %c0_12 = arith.constant 0 : index
    %11 = vector.load %arg1[%c320, %c0_12] : memref<328x64xf32, #tpu.memory_space<vmem>>, vector<1x32xf32>
    %12 = vector.broadcast %9 : vector<1x32xf32> to vector<16x32xf32>
    %13 = arith.subf %0, %12 : vector<16x32xf32>
    %14 = vector.extract_strided_slice %13 {offsets = [0, 0], sizes = [8, 32], strides = [1, 1]} : vector<16x32xf32> to vector<8x32xf32>
    %15 = vector.extract_strided_slice %13 {offsets = [8, 0], sizes = [8, 32], strides = [1, 1]} : vector<16x32xf32> to vector<8x32xf32>
    %16 = arith.addf %14, %15 : vector<8x32xf32>
    %17 = tpu.concatenate %16, %16 in 0 : vector<8x32xf32>, vector<8x32xf32> -> vector<16x32xf32>
    %18 = tpu.concatenate %1, %1, %1, %1 in 0 : vector<16x32xf32>, vector<16x32xf32>, vector<16x32xf32>, vector<16x32xf32> -> vector<64x32xf32>
    %19 = arith.mulf %18, %3 : vector<64x32xf32>
    %cst = arith.constant dense<0.000000e+00> : vector<64x16xf32>
    %20 = tpu.matmul %19, %2, %cst {dimension_numbers = #tpu.dot_dimension_numbers<[1], [1], [0], [0], [0, 0, 1, 0], [], []>} : vector<64x32xf32>, vector<16x32xf32>, vector<64x16xf32> -> vector<64x16xf32>
    %21 = arith.addf %20, %6 : vector<64x16xf32>
    %cst_13 = arith.constant dense<0xFF800000> : vector<64xf32>
    %22 = vector.multi_reduction <maximumf>, %21, %cst_13 [1] : vector<64x16xf32> to vector<64xf32>
    %23 = vector.shape_cast %22 : vector<64xf32> to vector<64x1xf32>
    %24 = vector.broadcast %23 : vector<64x1xf32> to vector<64x16xf32>
    %25 = arith.subf %21, %24 : vector<64x16xf32>
    %26 = math.exp %25 : vector<64x16xf32>
    %cst_14 = arith.constant dense<0.000000e+00> : vector<64xf32>
    %27 = vector.multi_reduction <add>, %26, %cst_14 [1] : vector<64x16xf32> to vector<64xf32>
    %28 = vector.shape_cast %27 : vector<64xf32> to vector<64x1xf32>
    %29 = tpu.reciprocal %28 {approx = true} : vector<64x1xf32> -> vector<64x1xf32>
    %30 = vector.broadcast %29 : vector<64x1xf32> to vector<64x16xf32>
    %31 = arith.mulf %26, %30 : vector<64x16xf32>
    %cst_15 = arith.constant dense<0.000000e+00> : vector<64x32xf32>
    %32 = tpu.matmul %31, %13, %cst_15 {dimension_numbers = #tpu.dot_dimension_numbers<[1], [0], [0], [1], [0, 0, 1, 1], [], []>} : vector<64x16xf32>, vector<16x32xf32>, vector<64x32xf32> -> vector<64x32xf32>
    %33 = arith.mulf %32, %4 : vector<64x32xf32>
    %34 = vector.extract_strided_slice %33 {offsets = [0, 0], sizes = [16, 32], strides = [1, 1]} : vector<64x32xf32> to vector<16x32xf32>
    %35 = vector.extract_strided_slice %33 {offsets = [16, 0], sizes = [16, 32], strides = [1, 1]} : vector<64x32xf32> to vector<16x32xf32>
    %36 = arith.addf %34, %35 : vector<16x32xf32>
    %37 = vector.extract_strided_slice %33 {offsets = [32, 0], sizes = [16, 32], strides = [1, 1]} : vector<64x32xf32> to vector<16x32xf32>
    %38 = arith.addf %36, %37 : vector<16x32xf32>
    %39 = vector.extract_strided_slice %33 {offsets = [48, 0], sizes = [16, 32], strides = [1, 1]} : vector<64x32xf32> to vector<16x32xf32>
    %40 = arith.addf %38, %39 : vector<16x32xf32>
    %41 = arith.addf %40, %17 : vector<16x32xf32>
    %42 = arith.mulf %41, %5 : vector<16x32xf32>
    %cst_16 = arith.constant dense<0.000000e+00> : vector<16x64xf32>
    %43 = tpu.matmul %42, %7, %cst_16 {dimension_numbers = #tpu.dot_dimension_numbers<[1], [0], [0], [1], [0, 0, 1, 1], [], []>} : vector<16x32xf32>, vector<32x64xf32>, vector<16x64xf32> -> vector<16x64xf32>
    %44 = vector.broadcast %10 : vector<1x64xf32> to vector<16x64xf32>
    %45 = arith.addf %43, %44 : vector<16x64xf32>
    %46 = arith.mulf %45, %45 : vector<16x64xf32>
    %47 = arith.mulf %45, %46 : vector<16x64xf32>
    %cst_17 = arith.constant 4.471500e-02 : f32
    %48 = vector.broadcast %cst_17 : f32 to vector<16x64xf32>
    %49 = arith.mulf %48, %47 : vector<16x64xf32>
    %50 = arith.addf %45, %49 : vector<16x64xf32>
    %cst_18 = arith.constant 0.797884583 : f32
    %51 = vector.broadcast %cst_18 : f32 to vector<16x64xf32>
    %52 = arith.mulf %51, %50 : vector<16x64xf32>
    %53 = math.tanh %52 : vector<16x64xf32>
    %cst_19 = arith.constant 1.000000e+00 : f32
    %54 = vector.broadcast %cst_19 : f32 to vector<16x64xf32>
    %55 = arith.addf %54, %53 : vector<16x64xf32>
    %cst_20 = arith.constant 5.000000e-01 : f32
    %56 = vector.broadcast %cst_20 : f32 to vector<16x64xf32>
    %57 = arith.mulf %56, %55 : vector<16x64xf32>
    %58 = arith.mulf %45, %57 : vector<16x64xf32>
    %cst_21 = arith.constant dense<0.000000e+00> : vector<16x32xf32>
    %59 = tpu.matmul %58, %8, %cst_21 {dimension_numbers = #tpu.dot_dimension_numbers<[1], [0], [0], [1], [0, 0, 1, 1], [], []>} : vector<16x64xf32>, vector<64x32xf32>, vector<16x32xf32> -> vector<16x32xf32>
    %60 = vector.broadcast %11 : vector<1x32xf32> to vector<16x32xf32>
    %61 = arith.addf %59, %60 : vector<16x32xf32>
    %62 = arith.addf %42, %61 : vector<16x32xf32>
    %c0_22 = arith.constant 0 : index
    %c0_23 = arith.constant 0 : index
    %63 = vector.load %arg2[%c0_22, %c0_23] : memref<16x32xf32, #tpu.memory_space<vmem>>, vector<16x32xf32>
    tpu.vector_store %arg2[%c0_22, %c0_23], %62 {strides = array<i32>} : memref<16x32xf32, #tpu.memory_space<vmem>>, vector<16x32xf32>,
    return
  }
}

</mosaic_0001>

<llo_original>
// kernel: block_forward.1
$region0: #{block_forward.1}
  #allocation0 [shape = 'u32[]', space=smem, size = 0x4, offset = 0x4, fixed_abs, tag = 'smem constant byte address 0x4 - core index']
  #allocation1 [shape = 'u32[144,128]{1,0:T(1,128)}', space=vmem, size = 0x12000, scoped, tag = 'internal scratch']
  %s0 = inlined_call_operand.vmem [shape: f32[48,32], index: 0, kind: input, shape index: {}]
  %s1 = inlined_call_operand.vmem [shape: f32[328,64], index: 1, kind: input, shape index: {}]
  %s2 = inlined_call_operand.hbm [shape: f32[16,32], index: 2, kind: output, shape index: {}]
  %s3 = sld [smem:[#allocation0]]
  $region18: #{block_forward.1} parent=0
    _
  %s5 = ssub.s32 1, %s3
  %s6 = scalar_select 0, %s5, %s3
  $region1: #{block_forward.1} parent=0
    #allocation2 [shape = 'u8[8192]{0}', space=vmem, size = 0x2000, scoped, tag = 'output window, operand 0, single buffered']
    #allocation3 [shape = 's32[1]{0}', space=sflag, size = 0x4, scoped, tag = 'scoped memory for block_forward.1']
    %7 = vsyncpa [#allocation3], 0
    // Predicated region
    $region2: #{block_forward.1} parent=1 // pred_check
      _
    $region3: #{block_forward.1} parent=1 // pred_check_branch
      %9 = sbr.rel (0) target = $region5
    $region4: #{block_forward.1} parent=1 // pred_region
      _
    $region5: #{block_forward.1} parent=1 // pred_fallthru
      _
    // Predicated region
    $region6: #{block_forward.1} parent=1 // pred_check
      _
    $region7: #{block_forward.1} parent=1 // pred_check_branch
      %11 = sbr.rel (0) target = $region9
    $region8: #{block_forward.1} parent=1 // pred_region
      _
    $region9: #{block_forward.1} parent=1 // pred_fallthru
      _
    %v12 = vld [vmem:[%s0] sm:$0xff]
    %v13 = vld [vmem:[%s0 + $0x8] sm:$0xff]
    %v14 = vld [vmem:[%s0 + $0x10] sm:$0xff]
    %v15 = vld [vmem:[%s0 + $0x18] sm:$0xff]
    %v16 = vld [vmem:[%s0 + $0x20] sm:$0xff]
    %v17 = vld [vmem:[%s0 + $0x28] sm:$0xff]
    %v18 = vld [vmem:[%s1] sm:$0xff]
    %v19 = vld [vmem:[%s1 + $0x8] sm:$0xff]
    %v20 = vld [vmem:[%s1 + $0x10] sm:$0xff]
    %v21 = vld [vmem:[%s1 + $0x18] sm:$0xff]
    %v22 = vld [vmem:[%s1 + $0x20] sm:$0xff]
    %v23 = vld [vmem:[%s1 + $0x28] sm:$0xff]
    %v24 = vld [vmem:[%s1 + $0x30] sm:$0xff]
    %v25 = vld [vmem:[%s1 + $0x38] sm:$0xff]
    %v26 = vld [vmem:[%s1 + $0x40] sm:$0xff]
    %v27 = vld [vmem:[%s1 + $0x48] sm:$0xff]
    %v28 = vld [vmem:[%s1 + $0x50] sm:$0xff]
    %v29 = vld [vmem:[%s1 + $0x58] sm:$0xff]
    %v30 = vld [vmem:[%s1 + $0x60] sm:$0xff]
    %v31 = vld [vmem:[%s1 + $0x68] sm:$0xff]
    %v32 = vld [vmem:[%s1 + $0x70] sm:$0xff]
    %v33 = vld [vmem:[%s1 + $0x78] sm:$0xff]
    %v34 = vld [vmem:[%s1 + $0x80] sm:$0xff]
    %v35 = vld [vmem:[%s1 + $0x88] sm:$0xff]
    %v36 = vld [vmem:[%s1 + $0x90] sm:$0xff]
    %v37 = vld [vmem:[%s1 + $0x98] sm:$0xff]
    %v38 = vld [vmem:[%s1 + $0xa0] sm:$0xff]
    %v39 = vld [vmem:[%s1 + $0xa8] sm:$0xff]
    %v40 = vld [vmem:[%s1 + $0xb0] sm:$0xff]
    %v41 = vld [vmem:[%s1 + $0xb8] sm:$0xff]
    %v42 = vld [vmem:[%s1 + $0xc0] sm:$0xff]
    %v43 = vld [vmem:[%s1 + $0xc8] sm:$0xff]
    %v44 = vld [vmem:[%s1 + $0xd0] sm:$0xff]
    %v45 = vld [vmem:[%s1 + $0xd8] sm:$0xff]
    %v46 = vld [vmem:[%s1 + $0xe0] sm:$0xff]
    %v47 = vld [vmem:[%s1 + $0xe8] sm:$0xff]
    %v48 = vld [vmem:[%s1 + $0xf0] sm:$0xff]
    %v49 = vld [vmem:[%s1 + $0xf8] sm:$0xff]
    %v50 = vld [vmem:[%s1 + $0x100] sm:$0xff]
    %v51 = vld [vmem:[%s1 + $0x108] sm:$0xff]
    %v52 = vld [vmem:[%s1 + $0x110] sm:$0xff]
    %v53 = vld [vmem:[%s1 + $0x118] sm:$0xff]
    %v54 = vld [vmem:[%s1 + $0x120] sm:$0xff]
    %v55 = vld [vmem:[%s1 + $0x128] sm:$0xff]
    %v56 = vld [vmem:[%s1 + $0x130] sm:$0x1]
    %v57 = vld [vmem:[%s1 + $0x138] sm:$0x1]
    %v58 = vld [vmem:[%s1 + $0x140] sm:$0x1]
    %v59 = vlaneseq
    %v60 = vshrl.u32 %v59, 7
    %v61 = vsub.s32 0, %v60
    %v62 = vrot.slane %v56, %v61
    %v63 = vsub.f32 %v12, %v62
    %v64 = vsub.f32 %v13, %v62
    %v65 = vadd.f32 %v63, %v64
    %v66 = vmul.f32 %v14, %v18
    %v67 = vmul.f32 %v15, %v19
    %v68 = vmul.f32 %v14, %v20
    %v69 = vmul.f32 %v15, %v21
    %v70 = vmul.f32 %v14, %v22
    %v71 = vmul.f32 %v15, %v23
    %v72 = vmul.f32 %v14, %v24
    %v73 = vmul.f32 %v15, %v25
    %vm74 = vcmask 261120
    %v76 = vsel %vm74, %v66, 0
    %v79 = vsel %vm74, %v67, 0
    %v82 = vsel %vm74, %v68, 0
    %v85 = vsel %vm74, %v69, 0
    %v88 = vsel %vm74, %v70, 0
    %v91 = vsel %vm74, %v71, 0
    %v94 = vsel %vm74, %v72, 0
    %v97 = vsel %vm74, %v73, 0
    %v100 = vsel %vm74, %v16, 0
    %v103 = vsel %vm74, %v17, 0
    %105 = vmatprep.subr.mxu0 0.0
    %106 = vmatpush1.xpose.msra.mxu0 %v100
    %107 = vmatprep.subr.mxu0 0.0
    %108 = vmatpush1.xpose.msra.mxu0 %v103
    %109 = vmatprep.subr.mxu0 0.0
    %110 = vmatpush1.xpose.msra.mxu0 0.0
    %111 = vmatprep.subr.mxu0 0.0
    %112 = vmatpush1.xpose.msra.mxu0 0.0
    %113 = vmatprep.subr.mxu0 0.0
    %114 = vmatpush1.xpose.msra.mxu0 0.0
    %115 = vmatprep.subr.mxu0 0.0
    %116 = vmatpush1.xpose.msra.mxu0 0.0
    %117 = vmatprep.subr.mxu0 0.0
    %118 = vmatpush1.xpose.msra.mxu0 0.0
    %119 = vmatprep.subr.mxu0 0.0
    %120 = vmatpush1.xpose.msra.mxu0 0.0
    %121 = vmatprep.subr.mxu0 0.0
    %122 = vmatpush1.xpose.msra.mxu0 0.0
    %123 = vmatprep.subr.mxu0 0.0
    %124 = vmatpush1.xpose.msra.mxu0 0.0
    %125 = vmatprep.subr.mxu0 0.0
    %126 = vmatpush1.xpose.msra.mxu0 0.0
    %127 = vmatprep.subr.mxu0 0.0
    %128 = vmatpush1.xpose.msra.mxu0 0.0
    %129 = vmatprep.subr.mxu0 0.0
    %130 = vmatpush1.xpose.msra.mxu0 0.0
    %131 = vmatprep.subr.mxu0 0.0
    %132 = vmatpush1.xpose.msra.mxu0 0.0
    %133 = vmatprep.subr.mxu0 0.0
    %134 = vmatpush1.xpose.msra.mxu0 0.0
    %135 = vmatprep.subr.mxu0 0.0
    %136 = vmatpush1.xpose.msra.mxu0 0.0
    %137 = vmatprep.subr.mxu0 0.0
    %138 = vmatpush1.xpose.msra.mxu0 0.0
    %139 = vmatprep.subr.mxu0 0.0
    %140 = vmatpush1.xpose.msra.mxu0 0.0
    %141 = vmatprep.subr.mxu0 0.0
    %142 = vmatpush1.xpose.msra.mxu0 0.0
    %143 = vmatprep.subr.mxu0 0.0
    %144 = vmatpush1.xpose.msra.mxu0 0.0
    %145 = vmatprep.subr.mxu0 0.0
    %146 = vmatpush1.xpose.msra.mxu0 0.0
    %147 = vmatprep.subr.mxu0 0.0
    %148 = vmatpush1.xpose.msra.mxu0 0.0
    %149 = vmatprep.subr.mxu0 0.0
    %150 = vmatpush1.xpose.msra.mxu0 0.0
    %151 = vmatprep.subr.mxu0 0.0
    %152 = vmatpush1.xpose.msra.mxu0 0.0
    %153 = vmatprep.subr.mxu0 0.0
    %154 = vmatpush1.xpose.msra.mxu0 0.0
    %155 = vmatprep.subr.mxu0 0.0
    %156 = vmatpush1.xpose.msra.mxu0 0.0
    %157 = vmatprep.subr.mxu0 0.0
    %158 = vmatpush1.xpose.msra.mxu0 0.0
    %159 = vmatprep.subr.mxu0 0.0
    %160 = vmatpush1.xpose.msra.mxu0 0.0
    %161 = vmatprep.subr.mxu0 0.0
    %162 = vmatpush1.xpose.msra.mxu0 0.0
    %163 = vmatprep.subr.mxu0 0.0
    %164 = vmatpush1.xpose.msra.mxu0 0.0
    %165 = vmatprep.subr.mxu0 0.0
    %166 = vmatpush1.xpose.msra.mxu0 0.0
    %167 = vmatprep.subr.mxu0 0.0
    %168 = vmatpush1.xpose.msra.mxu0 0.0
    %169 = vmatprep.mubr.f32.mxu0 0.0
    %170 = vmatmul.mubr.f32.gmra.mrb[0].mxu0 %v76
    %v171 = vpop.f32.mrb[0].mxu0
    %v172 = vadd.f32 %v36, %v171
    %v173 = vpop.f32.mrb[0].mxu0
    %174 = vmatprep.mubr.f32.mxu0 0.0
    %175 = vmatmul.mubr.f32.gmra.mrb[0].mxu0 %v79
    %v176 = vpop.f32.mrb[0].mxu0
    %v177 = vadd.f32 %v37, %v176
    %v178 = vpop.f32.mrb[0].mxu0
    %179 = vmatprep.mubr.f32.mxu0 0.0
    %180 = vmatmul.mubr.f32.gmra.mrb[0].mxu0 %v82
    %v181 = vpop.f32.mrb[0].mxu0
    %v182 = vadd.f32 %v38, %v181
    %v183 = vpop.f32.mrb[0].mxu0
    %184 = vmatprep.mubr.f32.mxu0 0.0
    %185 = vmatmul.mubr.f32.gmra.mrb[0].mxu0 %v85
    %v186 = vpop.f32.mrb[0].mxu0
    %v187 = vadd.f32 %v39, %v186
    %v188 = vpop.f32.mrb[0].mxu0
    %189 = vmatprep.mubr.f32.mxu0 0.0
    %190 = vmatmul.mubr.f32.gmra.mrb[0].mxu0 %v88
    %v191 = vpop.f32.mrb[0].mxu0
    %v192 = vadd.f32 %v40, %v191
    %v193 = vpop.f32.mrb[0].mxu0
    %194 = vmatprep.mubr.f32.mxu0 0.0
    %195 = vmatmul.mubr.f32.gmra.mrb[0].mxu0 %v91
    %v196 = vpop.f32.mrb[0].mxu0
    %v197 = vadd.f32 %v41, %v196
    %v198 = vpop.f32.mrb[0].mxu0
    %199 = vmatprep.mubr.f32.mxu0 0.0
    %200 = vmatmul.mubr.f32.gmra.mrb[0].mxu0 %v94
    %v201 = vpop.f32.mrb[0].mxu0
    %v202 = vadd.f32 %v42, %v201
    %v203 = vpop.f32.mrb[0].mxu0
    %204 = vmatprep.mubr.f32.mxu0 0.0
    %205 = vmatmul.mubr.f32.gmra.mrb[0].mxu0 %v97
    %v206 = vpop.f32.mrb[0].mxu0
    %v207 = vadd.f32 %v43, %v206
    %v208 = vpop.f32.mrb[0].mxu0
    %209 = vdwg.mxu0
    %vm210 = vcmask 130048
    %v211 = vsel %vm210, %v172, -inf
    %212 = vmax.xlane.f32.xlu0 %v211
    %v213 = vpop.xlane.xlu0 %212
    %v214 = vsel %vm210, %v177, -inf
    %215 = vmax.xlane.f32.xlu0 %v214
    %v216 = vpop.xlane.xlu0 %215
    %v217 = vsel %vm210, %v182, -inf
    %218 = vmax.xlane.f32.xlu0 %v217
    %v219 = vpop.xlane.xlu0 %218
    %v220 = vsel %vm210, %v187, -inf
    %221 = vmax.xlane.f32.xlu0 %v220
    %v222 = vpop.xlane.xlu0 %221
    %v223 = vsel %vm210, %v192, -inf
    %224 = vmax.xlane.f32.xlu0 %v223
    %v225 = vpop.xlane.xlu0 %224
    %v226 = vsel %vm210, %v197, -inf
    %227 = vmax.xlane.f32.xlu0 %v226
    %v228 = vpop.xlane.xlu0 %227
    %v229 = vsel %vm210, %v202, -inf
    %230 = vmax.xlane.f32.xlu0 %v229
    %v231 = vpop.xlane.xlu0 %230
    %v232 = vsel %vm210, %v207, -inf
    %233 = vmax.xlane.f32.xlu0 %v232
    %v234 = vpop.xlane.xlu0 %233
    %v235 = vsub.f32 %v172, %v213
    %v236 = vsub.f32 %v177, %v216
    %v237 = vsub.f32 %v182, %v219
    %v238 = vsub.f32 %v187, %v222
    %v239 = vsub.f32 %v192, %v225
    %v240 = vsub.f32 %v197, %v228
    %v241 = vsub.f32 %v202, %v231
    %v242 = vsub.f32 %v207, %v234
    %v243 = vmul.f32 %v235, 1.442695
    %v244 = vpow.pop %v243
    %v245 = vmul.f32 %v236, 1.442695
    %v246 = vpow.pop %v245
    %v247 = vmul.f32 %v237, 1.442695
    %v248 = vpow.pop %v247
    %v249 = vmul.f32 %v238, 1.442695
    %v250 = vpow.pop %v249
    %v251 = vmul.f32 %v239, 1.442695
    %v252 = vpow.pop %v251
    %v253 = vmul.f32 %v240, 1.442695
    %v254 = vpow.pop %v253
    %v255 = vmul.f32 %v241, 1.442695
    %v256 = vpow.pop %v255
    %v257 = vmul.f32 %v242, 1.442695
    %v258 = vpow.pop %v257
    %v259 = vsel %vm210, %v244, 0.0
    %260 = vadd.xlane.f32.xlu0 %v259
    %v261 = vpop.xlane.xlu0 %260
    %v262 = vsel %vm210, %v246, 0.0
    %263 = vadd.xlane.f32.xlu0 %v262
    %v264 = vpop.xlane.xlu0 %263
    %v265 = vsel %vm210, %v248, 0.0
    %266 = vadd.xlane.f32.xlu0 %v265
    %v267 = vpop.xlane.xlu0 %266
    %v268 = vsel %vm210, %v250, 0.0
    %269 = vadd.xlane.f32.xlu0 %v268
    %v270 = vpop.xlane.xlu0 %269
    %v271 = vsel %vm210, %v252, 0.0
    %272 = vadd.xlane.f32.xlu0 %v271
    %v273 = vpop.xlane.xlu0 %272
    %v274 = vsel %vm210, %v254, 0.0
    %275 = vadd.xlane.f32.xlu0 %v274
    %v276 = vpop.xlane.xlu0 %275
    %v277 = vsel %vm210, %v256, 0.0
    %278 = vadd.xlane.f32.xlu0 %v277
    %v279 = vpop.xlane.xlu0 %278
    %v280 = vsel %vm210, %v258, 0.0
    %281 = vadd.xlane.f32.xlu0 %v280
    %v282 = vpop.xlane.xlu0 %281
    %v283 = vrcp.pop %v261
    %v284 = vrcp.pop %v264
    %v285 = vrcp.pop %v267
    %v286 = vrcp.pop %v270
    %v287 = vrcp.pop %v273
    %v288 = vrcp.pop %v276
    %v289 = vrcp.pop %v279
    %v290 = vrcp.pop %v282
    %v291 = vmul.f32 %v244, %v283
    %v292 = vmul.f32 %v246, %v284
    %v293 = vmul.f32 %v248, %v285
    %v294 = vmul.f32 %v250, %v286
    %v295 = vmul.f32 %v252, %v287
    %v296 = vmul.f32 %v254, %v288
    %v297 = vmul.f32 %v256, %v289
    %v298 = vmul.f32 %v258, %v290
    %v300 = vsel %vm210, %v291, 0
    %v303 = vsel %vm210, %v292, 0
    %v306 = vsel %vm210, %v293, 0
    %v309 = vsel %vm210, %v294, 0
    %v312 = vsel %vm210, %v295, 0
    %v315 = vsel %vm210, %v296, 0
    %v318 = vsel %vm210, %v297, 0
    %v321 = vsel %vm210, %v298, 0
    %323 = vmatprep.subr.mxu0 0.0
    %324 = vmatpush1.msra.mxu0 %v63
    %325 = vmatprep.subr.mxu0 0.0
    %326 = vmatpush1.msra.mxu0 %v64
    %327 = vmatprep.subr.mxu0 0.0
    %328 = vmatpush1.msra.mxu0 0.0
    %329 = vmatprep.subr.mxu0 0.0
    %330 = vmatpush1.msra.mxu0 0.0
    %331 = vmatprep.subr.mxu0 0.0
    %332 = vmatpush1.msra.mxu0 0.0
    %333 = vmatprep.subr.mxu0 0.0
    %334 = vmatpush1.msra.mxu0 0.0
    %335 = vmatprep.subr.mxu0 0.0
    %336 = vmatpush1.msra.mxu0 0.0
    %337 = vmatprep.subr.mxu0 0.0
    %338 = vmatpush1.msra.mxu0 0.0
    %339 = vmatprep.subr.mxu0 0.0
    %340 = vmatpush1.msra.mxu0 0.0
    %341 = vmatprep.subr.mxu0 0.0
    %342 = vmatpush1.msra.mxu0 0.0
    %343 = vmatprep.subr.mxu0 0.0
    %344 = vmatpush1.msra.mxu0 0.0
    %345 = vmatprep.subr.mxu0 0.0
    %346 = vmatpush1.msra.mxu0 0.0
    %347 = vmatprep.subr.mxu0 0.0
    %348 = vmatpush1.msra.mxu0 0.0
    %349 = vmatprep.subr.mxu0 0.0
    %350 = vmatpush1.msra.mxu0 0.0
    %351 = vmatprep.subr.mxu0 0.0
    %352 = vmatpush1.msra.mxu0 0.0
    %353 = vmatprep.subr.mxu0 0.0
    %354 = vmatpush1.msra.mxu0 0.0
    %355 = vmatprep.subr.mxu0 0.0
    %356 = vmatpush1.msra.mxu0 0.0
    %357 = vmatprep.subr.mxu0 0.0
    %358 = vmatpush1.msra.mxu0 0.0
    %359 = vmatprep.subr.mxu0 0.0
    %360 = vmatpush1.msra.mxu0 0.0
    %361 = vmatprep.subr.mxu0 0.0
    %362 = vmatpush1.msra.mxu0 0.0
    %363 = vmatprep.subr.mxu0 0.0
    %364 = vmatpush1.msra.mxu0 0.0
    %365 = vmatprep.subr.mxu0 0.0
    %366 = vmatpush1.msra.mxu0 0.0
    %367 = vmatprep.subr.mxu0 0.0
    %368 = vmatpush1.msra.mxu0 0.0
    %369 = vmatprep.subr.mxu0 0.0
    %370 = vmatpush1.msra.mxu0 0.0
    %371 = vmatprep.subr.mxu0 0.0
    %372 = vmatpush1.msra.mxu0 0.0
    %373 = vmatprep.subr.mxu0 0.0
    %374 = vmatpush1.msra.mxu0 0.0
    %375 = vmatprep.subr.mxu0 0.0
    %376 = vmatpush1.msra.mxu0 0.0
    %377 = vmatprep.subr.mxu0 0.0
    %378 = vmatpush1.msra.mxu0 0.0
    %379 = vmatprep.subr.mxu0 0.0
    %380 = vmatpush1.msra.mxu0 0.0
    %381 = vmatprep.subr.mxu0 0.0
    %382 = vmatpush1.msra.mxu0 0.0
    %383 = vmatprep.subr.mxu0 0.0
    %384 = vmatpush1.msra.mxu0 0.0
    %385 = vmatprep.subr.mxu0 0.0
    %386 = vmatpush1.msra.mxu0 0.0
    %387 = vmatprep.mubr.f32.mxu0 0.0
    %388 = vmatmul.mubr.f32.gmra.mrb[0].mxu0 %v300
    %v389 = vpop.f32.mrb[0].mxu0
    %v390 = vadd.f32 0.0, %v389
    %v391 = vpop.f32.mrb[0].mxu0
    %392 = vmatprep.mubr.f32.mxu0 0.0
    %393 = vmatmul.mubr.f32.gmra.mrb[0].mxu0 %v303
    %v394 = vpop.f32.mrb[0].mxu0
    %v395 = vadd.f32 0.0, %v394
    %v396 = vpop.f32.mrb[0].mxu0
    %397 = vmatprep.mubr.f32.mxu0 0.0
    %398 = vmatmul.mubr.f32.gmra.mrb[0].mxu0 %v306
    %v399 = vpop.f32.mrb[0].mxu0
    %v400 = vadd.f32 0.0, %v399
    %v401 = vpop.f32.mrb[0].mxu0
    %402 = vmatprep.mubr.f32.mxu0 0.0
    %403 = vmatmul.mubr.f32.gmra.mrb[0].mxu0 %v309
    %v404 = vpop.f32.mrb[0].mxu0
    %v405 = vadd.f32 0.0, %v404
    %v406 = vpop.f32.mrb[0].mxu0
    %407 = vmatprep.mubr.f32.mxu0 0.0
    %408 = vmatmul.mubr.f32.gmra.mrb[0].mxu0 %v312
    %v409 = vpop.f32.mrb[0].mxu0
    %v410 = vadd.f32 0.0, %v409
    %v411 = vpop.f32.mrb[0].mxu0
    %412 = vmatprep.mubr.f32.mxu0 0.0
    %413 = vmatmul.mubr.f32.gmra.mrb[0].mxu0 %v315
    %v414 = vpop.f32.mrb[0].mxu0
    %v415 = vadd.f32 0.0, %v414
    %v416 = vpop.f32.mrb[0].mxu0
    %417 = vmatprep.mubr.f32.mxu0 0.0
    %418 = vmatmul.mubr.f32.gmra.mrb[0].mxu0 %v318
    %v419 = vpop.f32.mrb[0].mxu0
    %v420 = vadd.f32 0.0, %v419
    %v421 = vpop.f32.mrb[0].mxu0
    %422 = vmatprep.mubr.f32.mxu0 0.0
    %423 = vmatmul.mubr.f32.gmra.mrb[0].mxu0 %v321
    %v424 = vpop.f32.mrb[0].mxu0
    %v425 = vadd.f32 0.0, %v424
    %v426 = vpop.f32.mrb[0].mxu0
    %427 = vdwg.mxu0
    %v428 = vmul.f32 %v390, %v26
    %v429 = vmul.f32 %v395, %v27
    %v430 = vmul.f32 %v400, %v28
    %v431 = vmul.f32 %v405, %v29
    %v432 = vmul.f32 %v410, %v30
    %v433 = vmul.f32 %v415, %v31
    %v434 = vmul.f32 %v420, %v32
    %v435 = vmul.f32 %v425, %v33
    %v436 = vadd.f32 %v428, %v430
    %v437 = vadd.f32 %v429, %v431
    %v438 = vadd.f32 %v436, %v432
    %v439 = vadd.f32 %v437, %v433
    %v440 = vadd.f32 %v438, %v434
    %v441 = vadd.f32 %v439, %v435
    %v442 = vadd.f32 %v440, %v65
    %v443 = vadd.f32 %v441, %v65
    %v444 = vmul.f32 %v442, %v34
    %v445 = vmul.f32 %v443, %v35
    %v446 = vlaneseq
    %v447 = vshrl.u32 %v446, 7
    %v448 = vsub.s32 0, %v447
    %v449 = vrot.slane %v57, %v448
    %v451 = vsel %vm74, %v444, 0
    %v454 = vsel %vm74, %v445, 0
    %456 = vmatprep.subr.mxu0 0.0
    %457 = vmatpush1.msra.mxu0 %v44
    %458 = vmatprep.subr.mxu0 0.0
    %459 = vmatpush1.msra.mxu0 %v45
    %460 = vmatprep.subr.mxu0 0.0
    %461 = vmatpush1.msra.mxu0 %v46
    %462 = vmatprep.subr.mxu0 0.0
    %463 = vmatpush1.msra.mxu0 %v47
    %464 = vmatprep.subr.mxu0 0.0
    %465 = vmatpush1.msra.mxu0 0.0
    %466 = vmatprep.subr.mxu0 0.0
    %467 = vmatpush1.msra.mxu0 0.0
    %468 = vmatprep.subr.mxu0 0.0
    %469 = vmatpush1.msra.mxu0 0.0
    %470 = vmatprep.subr.mxu0 0.0
    %471 = vmatpush1.msra.mxu0 0.0
    %472 = vmatprep.subr.mxu0 0.0
    %473 = vmatpush1.msra.mxu0 0.0
    %474 = vmatprep.subr.mxu0 0.0
    %475 = vmatpush1.msra.mxu0 0.0
    %476 = vmatprep.subr.mxu0 0.0
    %477 = vmatpush1.msra.mxu0 0.0
    %478 = vmatprep.subr.mxu0 0.0
    %479 = vmatpush1.msra.mxu0 0.0
    %480 = vmatprep.subr.mxu0 0.0
    %481 = vmatpush1.msra.mxu0 0.0
    %482 = vmatprep.subr.mxu0 0.0
    %483 = vmatpush1.msra.mxu0 0.0
    %484 = vmatprep.subr.mxu0 0.0
    %485 = vmatpush1.msra.mxu0 0.0
    %486 = vmatprep.subr.mxu0 0.0
    %487 = vmatpush1.msra.mxu0 0.0
    %488 = vmatprep.subr.mxu0 0.0
    %489 = vmatpush1.msra.mxu0 0.0
    %490 = vmatprep.subr.mxu0 0.0
    %491 = vmatpush1.msra.mxu0 0.0
    %492 = vmatprep.subr.mxu0 0.0
    %493 = vmatpush1.msra.mxu0 0.0
    %494 = vmatprep.subr.mxu0 0.0
    %495 = vmatpush1.msra.mxu0 0.0
    %496 = vmatprep.subr.mxu0 0.0
    %497 = vmatpush1.msra.mxu0 0.0
    %498 = vmatprep.subr.mxu0 0.0
    %499 = vmatpush1.msra.mxu0 0.0
    %500 = vmatprep.subr.mxu0 0.0
    %501 = vmatpush1.msra.mxu0 0.0
    %502 = vmatprep.subr.mxu0 0.0
    %503 = vmatpush1.msra.mxu0 0.0
    %504 = vmatprep.subr.mxu0 0.0
    %505 = vmatpush1.msra.mxu0 0.0
    %506 = vmatprep.subr.mxu0 0.0
    %507 = vmatpush1.msra.mxu0 0.0
    %508 = vmatprep.subr.mxu0 0.0
    %509 = vmatpush1.msra.mxu0 0.0
    %510 = vmatprep.subr.mxu0 0.0
    %511 = vmatpush1.msra.mxu0 0.0
    %512 = vmatprep.subr.mxu0 0.0
    %513 = vmatpush1.msra.mxu0 0.0
    %514 = vmatprep.subr.mxu0 0.0
    %515 = vmatpush1.msra.mxu0 0.0
    %516 = vmatprep.subr.mxu0 0.0
    %517 = vmatpush1.msra.mxu0 0.0
    %518 = vmatprep.subr.mxu0 0.0
    %519 = vmatpush1.msra.mxu0 0.0
    %520 = vmatprep.mubr.f32.mxu0 0.0
    %521 = vmatmul.mubr.f32.gmra.mrb[0].mxu0 %v451
    %v522 = vpop.f32.mrb[0].mxu0
    %v523 = vadd.f32 %v449, %v522
    %v524 = vpop.f32.mrb[0].mxu0
    %525 = vmatprep.mubr.f32.mxu0 0.0
    %526 = vmatmul.mubr.f32.gmra.mrb[0].mxu0 %v454
    %v527 = vpop.f32.mrb[0].mxu0
    %v528 = vadd.f32 %v449, %v527
    %v529 = vpop.f32.mrb[0].mxu0
    %530 = vdwg.mxu0
    %v531 = vmul.f32 %v523, %v523
    %v532 = vmul.f32 %v528, %v528
    %v533 = vmul.f32 %v523, %v531
    %v534 = vmul.f32 %v528, %v532
    %v535 = vmul.f32 %v533, 0.044715
    %v536 = vmul.f32 %v534, 0.044715
    %v537 = vadd.f32 %v523, %v535
    %v538 = vadd.f32 %v528, %v536
    %v539 = vmul.f32 %v537, 0.7978846
    %v540 = vmul.f32 %v538, 0.7978846
    %v541 = vtanh.pop %v539
    %v542 = vtanh.pop %v540
    %v543 = vadd.f32 %v541, 1.0
    %v544 = vadd.f32 %v542, 1.0
    %v545 = vmul.f32 %v543, 0.5
    %v546 = vmul.f32 %v544, 0.5
    %v547 = vmul.f32 %v523, %v545
    %v548 = vmul.f32 %v528, %v546
    %v549 = vlaneseq
    %v550 = vshrl.u32 %v549, 7
    %v551 = vsub.s32 0, %v550
    %v552 = vrot.slane %v58, %v551
    %vm553 = vcmask 523264
    %v555 = vsel %vm553, %v547, 0
    %v558 = vsel %vm553, %v548, 0
    %560 = vmatprep.subr.mxu0 0.0
    %561 = vmatpush1.msra.mxu0 %v48
    %562 = vmatprep.subr.mxu0 0.0
    %563 = vmatpush1.msra.mxu0 %v49
    %564 = vmatprep.subr.mxu0 0.0
    %565 = vmatpush1.msra.mxu0 %v50
    %566 = vmatprep.subr.mxu0 0.0
    %567 = vmatpush1.msra.mxu0 %v51
    %568 = vmatprep.subr.mxu0 0.0
    %569 = vmatpush1.msra.mxu0 %v52
    %570 = vmatprep.subr.mxu0 0.0
    %571 = vmatpush1.msra.mxu0 %v53
    %572 = vmatprep.subr.mxu0 0.0
    %573 = vmatpush1.msra.mxu0 %v54
    %574 = vmatprep.subr.mxu0 0.0
    %575 = vmatpush1.msra.mxu0 %v55
    %576 = vmatprep.subr.mxu0 0.0
    %577 = vmatpush1.msra.mxu0 0.0
    %578 = vmatprep.subr.mxu0 0.0
    %579 = vmatpush1.msra.mxu0 0.0
    %580 = vmatprep.subr.mxu0 0.0
    %581 = vmatpush1.msra.mxu0 0.0
    %582 = vmatprep.subr.mxu0 0.0
    %583 = vmatpush1.msra.mxu0 0.0
    %584 = vmatprep.subr.mxu0 0.0
    %585 = vmatpush1.msra.mxu0 0.0
    %586 = vmatprep.subr.mxu0 0.0
    %587 = vmatpush1.msra.mxu0 0.0
    %588 = vmatprep.subr.mxu0 0.0
    %589 = vmatpush1.msra.mxu0 0.0
    %590 = vmatprep.subr.mxu0 0.0
    %591 = vmatpush1.msra.mxu0 0.0
    %592 = vmatprep.subr.mxu0 0.0
    %593 = vmatpush1.msra.mxu0 0.0
    %594 = vmatprep.subr.mxu0 0.0
    %595 = vmatpush1.msra.mxu0 0.0
    %596 = vmatprep.subr.mxu0 0.0
    %597 = vmatpush1.msra.mxu0 0.0
    %598 = vmatprep.subr.mxu0 0.0
    %599 = vmatpush1.msra.mxu0 0.0
    %600 = vmatprep.subr.mxu0 0.0
    %601 = vmatpush1.msra.mxu0 0.0
    %602 = vmatprep.subr.mxu0 0.0
    %603 = vmatpush1.msra.mxu0 0.0
    %604 = vmatprep.subr.mxu0 0.0
    %605 = vmatpush1.msra.mxu0 0.0
    %606 = vmatprep.subr.mxu0 0.0
    %607 = vmatpush1.msra.mxu0 0.0
    %608 = vmatprep.subr.mxu0 0.0
    %609 = vmatpush1.msra.mxu0 0.0
    %610 = vmatprep.subr.mxu0 0.0
    %611 = vmatpush1.msra.mxu0 0.0
    %612 = vmatprep.subr.mxu0 0.0
    %613 = vmatpush1.msra.mxu0 0.0
    %614 = vmatprep.subr.mxu0 0.0
    %615 = vmatpush1.msra.mxu0 0.0
    %616 = vmatprep.subr.mxu0 0.0
    %617 = vmatpush1.msra.mxu0 0.0
    %618 = vmatprep.subr.mxu0 0.0
    %619 = vmatpush1.msra.mxu0 0.0
    %620 = vmatprep.subr.mxu0 0.0
    %621 = vmatpush1.msra.mxu0 0.0
    %622 = vmatprep.subr.mxu0 0.0
    %623 = vmatpush1.msra.mxu0 0.0
    %624 = vmatprep.mubr.f32.mxu0 0.0
    %625 = vmatmul.mubr.f32.gmra.mrb[0].mxu0 %v555
    %v626 = vpop.f32.mrb[0].mxu0
    %v627 = vadd.f32 %v552, %v626
    %v628 = vpop.f32.mrb[0].mxu0
    %629 = vmatprep.mubr.f32.mxu0 0.0
    %630 = vmatmul.mubr.f32.gmra.mrb[0].mxu0 %v558
    %v631 = vpop.f32.mrb[0].mxu0
    %v632 = vadd.f32 %v552, %v631
    %v633 = vpop.f32.mrb[0].mxu0
    %634 = vdwg.mxu0
    %v635 = vadd.f32 %v444, %v627
    %v636 = vadd.f32 %v445, %v632
    %637 = vst.msk [vmem:[#allocation2] sm:$0xff] %vm74, %v635
    %638 = vst.msk [vmem:[#allocation2 + $0x8] sm:$0xff] %vm74, %v636
    // Predicated region
    $region10: #{block_forward.1} parent=1 // pred_check
      _
    $region11: #{block_forward.1} parent=1 // pred_check_branch
      %640 = sbr.rel (0) target = $region13
    $region12: #{block_forward.1} parent=1 // pred_region
      %s642 = ssub.s32 256, 256
      %643 = vsyncadd [#allocation3], %s642
      %s644 = sshll.u32 [#allocation2], 4
      %s645 = int_to_ptr.vmem [resolvable:$true] %s644
      %650 = dma.vmem_to_hbm [thread:$0]  %s645, 256, %s2, [#allocation3], 128, 128, 8
    $region13: #{block_forward.1} parent=1 // pred_fallthru
      _
    // Predicated region
    $region14: #{block_forward.1} parent=1 // pred_check
      _
    $region15: #{block_forward.1} parent=1 // pred_check_branch
      %652 = sbr.rel (0) target = $region17
    $region16: #{block_forward.1} parent=1 // pred_region
      %653 = dma.done [#allocation3], 256
    $region17: #{block_forward.1} parent=1 // pred_fallthru
      _
    %654 = vsyncpa [#allocation3], 1

</llo_original>
